<compile_context>
chip_gen: v7x
topology: tpu7x:2x2x1
jax: 0.10.0
libtpu: 0.0.40
codegen_flags: <defaults>
</compile_context>

<pallas_src>
import functools

import jax
import jax.numpy as jnp
from jax.experimental import pallas as pl
from jax.experimental.pallas import tpu as pltpu


def _round_up(v, m):
    return ((v + m - 1) // m) * m


def _convbn_kernel(a_ref, h_ref, w_ref, shift_ref, o_ref, xh_ref, *,
                   K, TL, nonlinear):
    # a_ref:     (1, TL, C_in)        main activation tile (compute dtype)
    # h_ref:     (1, 1, Kh, C_in)     halo tail rows for this tile
    # w_ref:     (K, C_in, C_out_p)   BN-scale-folded conv weights (compute dtype)
    # shift_ref: (1, C_out_p)         folded conv-bias + BN shift (f32)
    # o_ref:     (1, TL, C_out_p)
    # xh_ref:    (TL + Kh, C_in)      VMEM scratch: haloed tile

    # Tap 0 reads the main tile directly (aligned load, no scratch round-trip).
    acc = jnp.dot(a_ref[0], w_ref[0], preferred_element_type=jnp.float32)

    if K > 1:
        # Assemble the haloed tile once, then K-1 accumulating MXU matmuls on
        # statically shifted views of it.
        xh_ref[0:TL, :] = a_ref[0]
        xh_ref[TL:TL + (K - 1), :] = h_ref[0, 0]
        for k in range(1, K):
            acc = acc + jnp.dot(xh_ref[k:k + TL, :], w_ref[k],
                                preferred_element_type=jnp.float32)

    # Epilogue: folded conv bias + BatchNorm1d (eval) shift, then nonlinearity.
    y = acc + shift_ref[...]
    if nonlinear == "relu":
        y = jnp.maximum(y, 0.0)
    elif nonlinear == "tanh":
        y = jnp.tanh(y)          # EUP slot; hidden under MXU/DMA time.
    # Dropout(p=0.5) is identity in eval mode.

    o_ref[0] = y.astype(o_ref.dtype)


def conv_bn_block(x, params, *, nonlinear=None, compute_dtype=jnp.bfloat16,
                  out_dtype=None, out_layout="ncl", tl_cap=512):
    """Forward pass of ConvBNBlock (eval mode).

    Args:
      x: (N, C_in, L) float32, PyTorch NCL layout.
      params: conv weight/bias and BN gamma/beta/mean/var/eps.
      nonlinear: None | 'relu' | 'tanh'
      compute_dtype: dtype fed to the MXU (accumulation is always f32).
      out_dtype: output dtype (default: x.dtype).
      out_layout: 'ncl' (PyTorch parity) or 'nlc' (kernel-native, no transpose).
      tl_cap: max sequence tile length.
    """
    w = params["conv_weight"]          # (C_out, C_in, K)  (PyTorch layout)
    b = params["conv_bias"]            # (C_out,)
    gamma, beta = params["bn_gamma"], params["bn_beta"]
    mean, var, eps = params["bn_mean"], params["bn_var"], params["bn_eps"]

    N, C_in, L = x.shape
    C_out, _, K = w.shape
    assert (K - 1) % 2 == 0, "ConvBNBlock requires odd kernel_size"
    pad = (K - 1) // 2
    out_dtype = x.dtype if out_dtype is None else out_dtype

    # ---- Tile sizing ------------------------------------------------------
    # Lane-dense output; whole weight resident (no C_out grid axis).
    C_out_p = _round_up(C_out, 128)
    # Balanced L split: at most one sublane group of padding per tile.
    n_l = pl.cdiv(L, tl_cap)
    TL = _round_up(pl.cdiv(L, n_l), 8)
    L_p = n_l * TL
    Kh = max(K - 1, 1)

    # ---- Wrapper glue: layout, halo, BN folding (plain JAX) ---------------
    x_nlc = jnp.transpose(x, (0, 2, 1))                           # (N, L, C_in)
    x_hal = jnp.pad(x_nlc, ((0, 0), (pad, pad + (L_p - L)), (0, 0)))
    a = x_hal[:, :L_p, :].astype(compute_dtype)                   # main tiles
    if K > 1:
        # Halo tail of each tile: rows [(l+1)*TL, (l+1)*TL + K-1).  Tiny.
        idx = (jnp.arange(n_l)[:, None] + 1) * TL + jnp.arange(K - 1)[None, :]
        h = x_hal[:, idx, :].astype(compute_dtype)                # (N,n_l,K-1,C_in)
    else:
        h = jnp.zeros((N, n_l, Kh, C_in), compute_dtype)

    # Fold BN scale into the f32 weights and the conv bias into the BN shift:
    #   y = (conv(x, w) + b) * scale + (beta - mean*scale)
    #     =  conv(x, w*scale) + (beta - mean*scale + b*scale)
    scale = gamma / jnp.sqrt(var + eps)
    shift = beta - mean * scale + b * scale
    w_k = jnp.transpose(w, (2, 1, 0)) * scale[None, None, :]      # (K, C_in, C_out) f32
    w_k = jnp.pad(w_k, ((0, 0), (0, 0), (0, C_out_p - C_out))).astype(compute_dtype)
    shift_p = jnp.pad(shift, (0, C_out_p - C_out)).reshape(1, C_out_p)
    shift_p = shift_p.astype(jnp.float32)

    # ---- Cost estimate + VMEM budget --------------------------------------
    cdt = jnp.dtype(compute_dtype).itemsize
    odt = jnp.dtype(out_dtype).itemsize
    flops = 2 * N * L_p * K * C_in * C_out_p
    transcendentals = N * L_p * C_out_p if nonlinear == "tanh" else 0
    bytes_accessed = (N * L_p * C_in * cdt + N * n_l * Kh * C_in * cdt +
                      K * C_in * C_out_p * cdt + C_out_p * 4 +
                      N * L_p * C_out_p * odt)
    vmem_est = (2 * TL * C_in * cdt +            # main tile (double-buffered)
                2 * Kh * C_in * cdt +            # halo tile
                2 * TL * C_out_p * odt +         # output tile
                2 * K * C_in * C_out_p * cdt +   # resident weights
                C_out_p * 4 +                    # shift
                (TL + Kh) * C_in * cdt +         # halo scratch
                2 * TL * C_out_p * 4)            # f32 accumulator temp
    # Cap well under v7x's 64 MiB physical VMEM; >= 32 MiB default headroom.
    vmem_limit = int(min(48 * 2**20, max(32 * 2**20, 2 * vmem_est)))

    kernel = functools.partial(_convbn_kernel, K=K, TL=TL, nonlinear=nonlinear)

    out_nlc = pl.pallas_call(
        kernel,
        out_shape=jax.ShapeDtypeStruct((N, L_p, C_out_p), out_dtype),
        grid_spec=pltpu.PrefetchScalarGridSpec(
            num_scalar_prefetch=0,
            grid=(N, n_l),
            in_specs=[
                pl.BlockSpec((1, TL, C_in), lambda n, l: (n, l, 0)),
                pl.BlockSpec((1, 1, Kh, C_in), lambda n, l: (n, l, 0, 0)),
                # Constant block index -> weights / shift stay VMEM-resident.
                pl.BlockSpec((K, C_in, C_out_p), lambda n, l: (0, 0, 0)),
                pl.BlockSpec((1, C_out_p), lambda n, l: (0, 0)),
            ],
            out_specs=pl.BlockSpec((1, TL, C_out_p), lambda n, l: (n, l, 0)),
            scratch_shapes=[pltpu.VMEM((TL + Kh, C_in), compute_dtype)],
        ),
        compiler_params=pltpu.CompilerParams(
            dimension_semantics=("parallel", "parallel"),
            vmem_limit_bytes=vmem_limit),
        cost_estimate=pl.CostEstimate(flops=int(flops),
                                      transcendentals=int(transcendentals),
                                      bytes_accessed=int(bytes_accessed)),
    )(a, h, w_k, shift_p)

    out = out_nlc[:, :L, :C_out]
    if out_layout == "ncl":
        out = jnp.transpose(out, (0, 2, 1))      # PyTorch NCL parity
    return out


# ---------------------------- references ------------------------------------

def _reference_f32(x, params, *, nonlinear=None):
    """Pure f32 PyTorch-parity reference."""
    w, b = params["conv_weight"], params["conv_bias"]
    pad = (w.shape[2] - 1) // 2
    y = jax.lax.conv_general_dilated(
        x, w, window_strides=(1,), padding=[(pad, pad)],
        dimension_numbers=("NCH", "OIH", "NCH"))
    y = y + b[None, :, None]
    scale = params["bn_gamma"] / jnp.sqrt(params["bn_var"] + params["bn_eps"])
    shift = params["bn_beta"] - params["bn_mean"] * scale
    y = y * scale[None, :, None] + shift[None, :, None]
    if nonlinear == "relu":
        y = jnp.maximum(y, 0.0)
    elif nonlinear == "tanh":
        y = jnp.tanh(y)
    return y


def _reference_same_contract(x, params, *, nonlinear=None,
                             compute_dtype=jnp.bfloat16):
    """Reference that mirrors the kernel's bf16-in / f32-accumulate contract
    (BN scale folded into weights in f32 before the cast)."""
    w, b = params["conv_weight"], params["conv_bias"]
    pad = (w.shape[2] - 1) // 2
    scale = params["bn_gamma"] / jnp.sqrt(params["bn_var"] + params["bn_eps"])
    shift = params["bn_beta"] - params["bn_mean"] * scale + b * scale
    w_folded = (w * scale[:, None, None]).astype(compute_dtype)
    y = jax.lax.conv_general_dilated(
        x.astype(compute_dtype), w_folded, window_strides=(1,),
        padding=[(pad, pad)], dimension_numbers=("NCH", "OIH", "NCH"),
        preferred_element_type=jnp.float32)
    y = y + shift[None, :, None]
    if nonlinear == "relu":
        y = jnp.maximum(y, 0.0)
    elif nonlinear == "tanh":
        y = jnp.tanh(y)
    return y


if __name__ == "__main__":
    # Small shapes consistent with ConvBNBlock's Conv1d/BatchNorm1d forward.
    N, C_in, C_out, L, K = 2, 4, 8, 16, 5

    key = jax.random.PRNGKey(0)
    k_x, k_w, k_b, k_g, k_be, k_m, k_v = jax.random.split(key, 7)

    x = jax.random.normal(k_x, (N, C_in, L), dtype=jnp.float32)
    params = {
        "conv_weight": jax.random.normal(k_w, (C_out, C_in, K),
                                         dtype=jnp.float32) * 0.2,
        "conv_bias": jax.random.normal(k_b, (C_out,), dtype=jnp.float32) * 0.1,
        "bn_gamma": 1.0 + 0.1 * jax.random.normal(k_g, (C_out,),
                                                  dtype=jnp.float32),
        "bn_beta": 0.1 * jax.random.normal(k_be, (C_out,), dtype=jnp.float32),
        "bn_mean": 0.1 * jax.random.normal(k_m, (C_out,), dtype=jnp.float32),
        "bn_var": jnp.abs(jax.random.normal(k_v, (C_out,),
                                            dtype=jnp.float32)) + 0.5,
        "bn_eps": 1e-5,
    }

    # 1) Default boundary: PyTorch-parity NCL layout / f32 output, ReLU.
    out = conv_bn_block(x, params, nonlinear="relu")
    out = jax.block_until_ready(out)
    assert out.shape == (N, C_out, L)
    ref_same = _reference_same_contract(x, params, nonlinear="relu")
    assert jnp.allclose(out, ref_same, atol=1e-3, rtol=1e-3), \
        "mismatch vs same-contract reference"
    ref_f32 = _reference_f32(x, params, nonlinear="relu")
    assert jnp.allclose(out, ref_f32, atol=3e-2, rtol=3e-2), \
        "mismatch vs f32 reference (beyond documented bf16 tolerance)"

    # 2) Perf-oriented boundary: NLC layout + bf16 output (what a fused conv
    #    stack would feed to the next ConvBNBlock), Tanh nonlinearity.
    out_nlc = conv_bn_block(x, params, nonlinear="tanh",
                            out_dtype=jnp.bfloat16, out_layout="nlc")
    out_nlc = jax.block_until_ready(out_nlc)
    assert out_nlc.shape == (N, L, C_out)
    ref_tanh = jnp.transpose(_reference_f32(x, params, nonlinear="tanh"),
                             (0, 2, 1))
    assert jnp.allclose(out_nlc.astype(jnp.float32), ref_tanh,
                        atol=5e-2, rtol=5e-2), "mismatch (nlc/bf16 path)"

    print("KERNEL_OK")
</pallas_src>

<mosaic_0001>
module attributes {stable_mosaic.version = 11 : i64} {
  func.func @_convbn_kernel(%arg0: i32, %arg1: i32, %arg2: memref<1x16x4xbf16, #tpu.memory_space<vmem>>, %arg3: memref<1x1x4x4xbf16, #tpu.memory_space<vmem>>, %arg4: memref<5x4x128xbf16, #tpu.memory_space<vmem>>, %arg5: memref<1x128xf32, #tpu.memory_space<vmem>>, %arg6: memref<1x16x128xf32, #tpu.memory_space<vmem>>, %arg7: memref<20x4xbf16, #tpu.memory_space<vmem>>) attributes {dimension_semantics = [#tpu.dimension_semantics<parallel>, #tpu.dimension_semantics<parallel>], iteration_bounds = array<i64: 2, 1>, scalar_prefetch = 0 : i64, scratch_operands = 1 : i64, tpu.core_type = #tpu.core_type<tc>, window_params = [{transform_indices = @transform_0, window_bounds = array<i64: 1, 16, 4>}, {transform_indices = @transform_1, window_bounds = array<i64: 1, 1, 4, 4>}, {pipeline_mode = #tpu.pipeline_mode<synchronous>, transform_indices = @transform_2, window_bounds = array<i64: 5, 4, 128>}, {pipeline_mode = #tpu.pipeline_mode<synchronous>, transform_indices = @transform_3, window_bounds = array<i64: 1, 128>}, {transform_indices = @transform_4, window_bounds = array<i64: 1, 16, 128>}]} {
    %c0 = arith.constant 0 : index
    %c0_0 = arith.constant 0 : index
    %c0_1 = arith.constant 0 : index
    %0 = vector.load %arg2[%c0, %c0_0, %c0_1] : memref<1x16x4xbf16, #tpu.memory_space<vmem>>, vector<1x16x4xbf16>
    %1 = vector.shape_cast %0 : vector<1x16x4xbf16> to vector<16x4xbf16>
    %c0_2 = arith.constant 0 : index
    %c0_3 = arith.constant 0 : index
    %c0_4 = arith.constant 0 : index
    %2 = vector.load %arg4[%c0_2, %c0_3, %c0_4] : memref<5x4x128xbf16, #tpu.memory_space<vmem>>, vector<1x4x128xbf16>
    %3 = vector.shape_cast %2 : vector<1x4x128xbf16> to vector<4x128xbf16>
    %cst = arith.constant dense<0.000000e+00> : vector<16x128xf32>
    %4 = tpu.matmul %1, %3, %cst {dimension_numbers = #tpu.dot_dimension_numbers<[1], [0], [0], [1], [0, 0, 1, 1], [], []>} : vector<16x4xbf16>, vector<4x128xbf16>, vector<16x128xf32> -> vector<16x128xf32>
    %c0_5 = arith.constant 0 : index
    %c0_6 = arith.constant 0 : index
    %c0_7 = arith.constant 0 : index
    %5 = vector.load %arg2[%c0_5, %c0_6, %c0_7] : memref<1x16x4xbf16, #tpu.memory_space<vmem>>, vector<1x16x4xbf16>
    %6 = vector.shape_cast %5 : vector<1x16x4xbf16> to vector<16x4xbf16>
    %c0_8 = arith.constant 0 : index
    %c0_9 = arith.constant 0 : index
    %7 = vector.load %arg7[%c0_8, %c0_9] : memref<20x4xbf16, #tpu.memory_space<vmem>>, vector<16x4xbf16>
    tpu.vector_store %arg7[%c0_8, %c0_9], %6 {strides = array<i32>} : memref<20x4xbf16, #tpu.memory_space<vmem>>, vector<16x4xbf16>,
    %c0_10 = arith.constant 0 : index
    %c0_11 = arith.constant 0 : index
    %c0_12 = arith.constant 0 : index
    %c0_13 = arith.constant 0 : index
    %8 = vector.load %arg3[%c0_10, %c0_11, %c0_12, %c0_13] : memref<1x1x4x4xbf16, #tpu.memory_space<vmem>>, vector<1x1x4x4xbf16>
    %9 = vector.shape_cast %8 : vector<1x1x4x4xbf16> to vector<4x4xbf16>
    %c16 = arith.constant 16 : index
    %c0_14 = arith.constant 0 : index
    %10 = vector.load %arg7[%c16, %c0_14] : memref<20x4xbf16, #tpu.memory_space<vmem>>, vector<4x4xbf16>
    tpu.vector_store %arg7[%c16, %c0_14], %9 {strides = array<i32>} : memref<20x4xbf16, #tpu.memory_space<vmem>>, vector<4x4xbf16>,
    %c1 = arith.constant 1 : index
    %c0_15 = arith.constant 0 : index
    %11 = vector.load %arg7[%c1, %c0_15] : memref<20x4xbf16, #tpu.memory_space<vmem>>, vector<16x4xbf16>
    %c1_16 = arith.constant 1 : index
    %c0_17 = arith.constant 0 : index
    %c0_18 = arith.constant 0 : index
    %12 = vector.load %arg4[%c1_16, %c0_17, %c0_18] : memref<5x4x128xbf16, #tpu.memory_space<vmem>>, vector<1x4x128xbf16>
    %13 = vector.shape_cast %12 : vector<1x4x128xbf16> to vector<4x128xbf16>
    %cst_19 = arith.constant dense<0.000000e+00> : vector<16x128xf32>
    %14 = tpu.matmul %11, %13, %cst_19 {dimension_numbers = #tpu.dot_dimension_numbers<[1], [0], [0], [1], [0, 0, 1, 1], [], []>} : vector<16x4xbf16>, vector<4x128xbf16>, vector<16x128xf32> -> vector<16x128xf32>
    %15 = arith.addf %4, %14 : vector<16x128xf32>
    %c2 = arith.constant 2 : index
    %c0_20 = arith.constant 0 : index
    %16 = vector.load %arg7[%c2, %c0_20] : memref<20x4xbf16, #tpu.memory_space<vmem>>, vector<16x4xbf16>
    %c2_21 = arith.constant 2 : index
    %c0_22 = arith.constant 0 : index
    %c0_23 = arith.constant 0 : index
    %17 = vector.load %arg4[%c2_21, %c0_22, %c0_23] : memref<5x4x128xbf16, #tpu.memory_space<vmem>>, vector<1x4x128xbf16>
    %18 = vector.shape_cast %17 : vector<1x4x128xbf16> to vector<4x128xbf16>
    %cst_24 = arith.constant dense<0.000000e+00> : vector<16x128xf32>
    %19 = tpu.matmul %16, %18, %cst_24 {dimension_numbers = #tpu.dot_dimension_numbers<[1], [0], [0], [1], [0, 0, 1, 1], [], []>} : vector<16x4xbf16>, vector<4x128xbf16>, vector<16x128xf32> -> vector<16x128xf32>
    %20 = arith.addf %15, %19 : vector<16x128xf32>
    %c3 = arith.constant 3 : index
    %c0_25 = arith.constant 0 : index
    %21 = vector.load %arg7[%c3, %c0_25] : memref<20x4xbf16, #tpu.memory_space<vmem>>, vector<16x4xbf16>
    %c3_26 = arith.constant 3 : index
    %c0_27 = arith.constant 0 : index
    %c0_28 = arith.constant 0 : index
    %22 = vector.load %arg4[%c3_26, %c0_27, %c0_28] : memref<5x4x128xbf16, #tpu.memory_space<vmem>>, vector<1x4x128xbf16>
    %23 = vector.shape_cast %22 : vector<1x4x128xbf16> to vector<4x128xbf16>
    %cst_29 = arith.constant dense<0.000000e+00> : vector<16x128xf32>
    %24 = tpu.matmul %21, %23, %cst_29 {dimension_numbers = #tpu.dot_dimension_numbers<[1], [0], [0], [1], [0, 0, 1, 1], [], []>} : vector<16x4xbf16>, vector<4x128xbf16>, vector<16x128xf32> -> vector<16x128xf32>
    %25 = arith.addf %20, %24 : vector<16x128xf32>
    %c4 = arith.constant 4 : index
    %c0_30 = arith.constant 0 : index
    %26 = vector.load %arg7[%c4, %c0_30] : memref<20x4xbf16, #tpu.memory_space<vmem>>, vector<16x4xbf16>
    %c4_31 = arith.constant 4 : index
    %c0_32 = arith.constant 0 : index
    %c0_33 = arith.constant 0 : index
    %27 = vector.load %arg4[%c4_31, %c0_32, %c0_33] : memref<5x4x128xbf16, #tpu.memory_space<vmem>>, vector<1x4x128xbf16>
    %28 = vector.shape_cast %27 : vector<1x4x128xbf16> to vector<4x128xbf16>
    %cst_34 = arith.constant dense<0.000000e+00> : vector<16x128xf32>
    %29 = tpu.matmul %26, %28, %cst_34 {dimension_numbers = #tpu.dot_dimension_numbers<[1], [0], [0], [1], [0, 0, 1, 1], [], []>} : vector<16x4xbf16>, vector<4x128xbf16>, vector<16x128xf32> -> vector<16x128xf32>
    %30 = arith.addf %25, %29 : vector<16x128xf32>
    %c0_35 = arith.constant 0 : index
    %c0_36 = arith.constant 0 : index
    %31 = vector.load %arg5[%c0_35, %c0_36] : memref<1x128xf32, #tpu.memory_space<vmem>>, vector<1x128xf32>
    %32 = vector.broadcast %31 : vector<1x128xf32> to vector<16x128xf32>
    %33 = arith.addf %30, %32 : vector<16x128xf32>
    %cst_37 = arith.constant 0.000000e+00 : f32
    %34 = vector.broadcast %cst_37 : f32 to vector<16x128xf32>
    %35 = arith.maximumf %33, %34 : vector<16x128xf32>
    %c0_38 = arith.constant 0 : index
    %c0_39 = arith.constant 0 : index
    %c0_40 = arith.constant 0 : index
    %36 = vector.load %arg6[%c0_38, %c0_39, %c0_40] : memref<1x16x128xf32, #tpu.memory_space<vmem>>, vector<1x16x128xf32>
    %37 = vector.shape_cast %36 : vector<1x16x128xf32> to vector<16x128xf32>
    %38 = vector.shape_cast %35 : vector<16x128xf32> to vector<1x16x128xf32>
    tpu.vector_store %arg6[%c0_38, %c0_39, %c0_40], %38 {strides = array<i32>} : memref<1x16x128xf32, #tpu.memory_space<vmem>>, vector<1x16x128xf32>,
    return
  }
  func.func @transform_0(%arg0: i32, %arg1: i32) -> (i32, i32, i32) {
    %c0_i32 = arith.constant 0 : i32
    %c0_i32_0 = arith.constant 0 : i32
    return %arg0, %arg1, %c0_i32 : i32, i32, i32
  }
  func.func @transform_1(%arg0: i32, %arg1: i32) -> (i32, i32, i32, i32) {
    %c0_i32 = arith.constant 0 : i32
    %c0_i32_0 = arith.constant 0 : i32
    %c0_i32_1 = arith.constant 0 : i32
    return %arg0, %arg1, %c0_i32, %c0_i32_0 : i32, i32, i32, i32
  }
  func.func @transform_2(%arg0: i32, %arg1: i32) -> (i32, i32, i32) {
    %c0_i32 = arith.constant 0 : i32
    %c0_i32_0 = arith.constant 0 : i32
    %c0_i32_1 = arith.constant 0 : i32
    %c0_i32_2 = arith.constant 0 : i32
    return %c0_i32, %c0_i32_0, %c0_i32_1 : i32, i32, i32
  }
  func.func @transform_3(%arg0: i32, %arg1: i32) -> (i32, i32) {
    %c0_i32 = arith.constant 0 : i32
    %c0_i32_0 = arith.constant 0 : i32
    %c0_i32_1 = arith.constant 0 : i32
    return %c0_i32, %c0_i32_0 : i32, i32
  }
  func.func @transform_4(%arg0: i32, %arg1: i32) -> (i32, i32, i32) {
    %c0_i32 = arith.constant 0 : i32
    %c0_i32_0 = arith.constant 0 : i32
    return %arg0, %arg1, %c0_i32 : i32, i32, i32
  }
}

</mosaic_0001>

<llo_original>
// kernel: tpu_custom_call.1
$region0: #{tpu_custom_call.1}
  #allocation0 [shape = 'u32[]', space=smem, size = 0x4, offset = 0x4, fixed_abs, tag = 'smem constant byte address 0x4 - core index']
  #allocation1 [shape = 'u32[144,128]{1,0:T(1,128)}', space=vmem, size = 0x12000, scoped, tag = 'internal scratch']
  #allocation2 [shape = 'bf16[20,4]{1,0:T(8,128)(2,1)}', space=vmem, size = 0x1800, scoped, tag = 'scratch operand']
  %s0 = inlined_call_operand.vmem [shape: bf16[2,16,4], index: 0, kind: input, shape index: {}]
  %s1 = inlined_call_operand.vmem [shape: bf16[2,1,4,4], index: 1, kind: input, shape index: {}]
  %s2 = inlined_call_operand.vmem [shape: bf16[5,4,128], index: 2, kind: input, shape index: {}]
  %s3 = inlined_call_operand.vmem [shape: f32[1,128], index: 3, kind: input, shape index: {}]
  %s4 = inlined_call_operand.hbm [shape: f32[2,16,128], index: 4, kind: output, shape index: {}]
  %s5 = sld [smem:[#allocation0]]
  $region49: #{tpu_custom_call.1} parent=0
    _
  %s7 = ssub.s32 1, %s5
  %s8 = scalar_select 0, %s7, %s5
  $region1: #{tpu_custom_call.1} parent=0
    #allocation3 [shape = 'u8[16384]{0}', space=vmem, size = 0x4000, scoped, tag = 'output window, operand 0']
    #allocation4 [shape = 's32[2]{0}', space=sflag, size = 0x8, scoped, tag = 'scoped memory for tpu_custom_call.1']
    %9 = vsyncpa [#allocation4], 0
    %s10 = scalar_lea.sflag [#allocation4], 1
    %11 = vsyncpa %s10, 0
    loop: start=0, step=1, limit=4
    $region2: #{tpu_custom_call.1} parent=1 // loop_pre_header
      _
    $region3: #{tpu_custom_call.1} parent=1 // loop_header
      %s13 = sphi 0, %s17
      %p14 = scmp.ge.s32.totalorder %s13, 4
      %s20 = sphi 0, %s32
      %s21 = sphi 0, %s28
      %s22 = sphi 0, %s20
      %s23 = sphi 0, %s21
      %s24 = sphi 0, %s22
      %s25 = sphi 0, %s23
      %s37 = sphi 0, %s39
      %s40 = sphi 0, %s37
      %s41 = sphi 0, %s40
      %s57 = sphi 0, %s41
      %s65 = sphi 0, %s67
      %s68 = sphi 0, %s65
      %s69 = sphi 0, %s68
      %s85 = sphi 0, %s69
      %s89 = sphi 0, %s89
      %s91 = sphi 0, %s89
      %s92 = sphi 0, %s91
      %s106 = sphi 0, %s92
      %s110 = sphi 0, %s110
      %s112 = sphi 0, %s110
      %s113 = sphi 0, %s112
      %s127 = sphi 0, %s113
      %s135 = sphi 0, %s137
      %s138 = sphi 0, %s135
      %s139 = sphi 0, %s138
      %s155 = sphi 0, %s139
    $region4: #{tpu_custom_call.1} parent=1 // loop_header_branch
      %16 = sbr.rel (%p14) target = $region8
    $region5: #{tpu_custom_call.1} parent=1 // loop_body
      %s18 = ssub.s32 %s13, 1
      %s19 = ssub.s32 %s13, 2
      %s26 = sadd.s32 1, %s21
      %p27 = scmp.ge.s32.totalorder %s26, 1
      %s28 = scalar_select %p27, 0, %s26
      %s29 = sadd.s32 1, %s20
      %s30 = scalar_select %p27, %s29, %s20
      %p31 = scmp.ge.s32.totalorder %s30, 2
      %s32 = scalar_select %p31, 0, %s30
      %s33 = ssub.s32 %s20, %s32
      %s34 = ssub.s32 %s21, %s28
      %s35 = sor.u32 %s33, %s34
      %p36 = scmp.eq.s32.totalorder %s35, 0
      %s38 = sadd.s32 %s37, 1
      %s39 = scalar_select %p36, %s37, %s38
      %p42 = pneg %p36
      %p43 = scmp.eq.s32.totalorder %s13, 1
      %p44 = por %p42, %p43
      %p45 = scmp.ne.s32.totalorder %s37, %s40
      %p46 = scmp.eq.s32.totalorder %s13, 0
      %p47 = por %p45, %p46
      %p48 = scmp.ne.s32.totalorder %s37, %s40
      %p49 = scmp.eq.s32.totalorder %s18, 1
      %p50 = por %p48, %p49
      %p51 = scmp.ne.s32.totalorder %s40, %s41
      %p52 = scmp.eq.s32.totalorder %s18, 0
      %p53 = por %p51, %p52
      %p54 = scmp.ne.s32.totalorder %s40, %s41
      %p55 = scmp.eq.s32.totalorder %s19, 1
      %p56 = por %p54, %p55
      %p58 = scmp.ne.s32.totalorder %s41, %s57
      %p59 = scmp.eq.s32.totalorder %s19, 0
      %p60 = por %p58, %p59
      %s61 = ssub.s32 %s20, %s32
      %s62 = ssub.s32 %s21, %s28
      %s63 = sor.u32 %s61, %s62
      %p64 = scmp.eq.s32.totalorder %s63, 0
      %s66 = sadd.s32 %s65, 1
      %s67 = scalar_select %p64, %s65, %s66
      %p70 = pneg %p64
      %p71 = scmp.eq.s32.totalorder %s13, 1
      %p72 = por %p70, %p71
      %p73 = scmp.ne.s32.totalorder %s65, %s68
      %p74 = scmp.eq.s32.totalorder %s13, 0
      %p75 = por %p73, %p74
      %p76 = scmp.ne.s32.totalorder %s65, %s68
      %p77 = scmp.eq.s32.totalorder %s18, 1
      %p78 = por %p76, %p77
      %p79 = scmp.ne.s32.totalorder %s68, %s69
      %p80 = scmp.eq.s32.totalorder %s18, 0
      %p81 = por %p79, %p80
      %p82 = scmp.ne.s32.totalorder %s68, %s69
      %p83 = scmp.eq.s32.totalorder %s19, 1
      %p84 = por %p82, %p83
      %p86 = scmp.ne.s32.totalorder %s69, %s85
      %p87 = scmp.eq.s32.totalorder %s19, 0
      %p88 = por %p86, %p87
      %s90 = sadd.s32 %s89, 1
      %p93 = scmp.eq.s32.totalorder %s13, 1
      %p94 = scmp.ne.s32.totalorder %s89, %s91
      %p95 = scmp.eq.s32.totalorder %s13, 0
      %p96 = por %p94, %p95
      %p97 = scmp.ne.s32.totalorder %s89, %s91
      %p98 = scmp.eq.s32.totalorder %s18, 1
      %p99 = por %p97, %p98
      %p100 = scmp.ne.s32.totalorder %s91, %s92
      %p101 = scmp.eq.s32.totalorder %s18, 0
      %p102 = por %p100, %p101
      %p103 = scmp.ne.s32.totalorder %s91, %s92
      %p104 = scmp.eq.s32.totalorder %s19, 1
      %p105 = por %p103, %p104
      %p107 = scmp.ne.s32.totalorder %s92, %s106
      %p108 = scmp.eq.s32.totalorder %s19, 0
      %p109 = por %p107, %p108
      %s111 = sadd.s32 %s110, 1
      %p114 = scmp.eq.s32.totalorder %s13, 1
      %p115 = scmp.ne.s32.totalorder %s110, %s112
      %p116 = scmp.eq.s32.totalorder %s13, 0
      %p117 = por %p115, %p116
      %p118 = scmp.ne.s32.totalorder %s110, %s112
      %p119 = scmp.eq.s32.totalorder %s18, 1
      %p120 = por %p118, %p119
      %p121 = scmp.ne.s32.totalorder %s112, %s113
      %p122 = scmp.eq.s32.totalorder %s18, 0
      %p123 = por %p121, %p122
      %p124 = scmp.ne.s32.totalorder %s112, %s113
      %p125 = scmp.eq.s32.totalorder %s19, 1
      %p126 = por %p124, %p125
      %p128 = scmp.ne.s32.totalorder %s113, %s127
      %p129 = scmp.eq.s32.totalorder %s19, 0
      %p130 = por %p128, %p129
      %s131 = ssub.s32 %s20, %s32
      %s132 = ssub.s32 %s21, %s28
      %s133 = sor.u32 %s131, %s132
      %p134 = scmp.eq.s32.totalorder %s133, 0
      %s136 = sadd.s32 %s135, 1
      %s137 = scalar_select %p134, %s135, %s136
      %p140 = pneg %p134
      %p141 = scmp.eq.s32.totalorder %s13, 1
      %p142 = por %p140, %p141
      %p143 = scmp.ne.s32.totalorder %s135, %s138
      %p144 = scmp.eq.s32.totalorder %s13, 0
      %p145 = por %p143, %p144
      %p146 = scmp.ne.s32.totalorder %s135, %s138
      %p147 = scmp.eq.s32.totalorder %s18, 1
      %p148 = por %p146, %p147
      %p149 = scmp.ne.s32.totalorder %s138, %s139
      %p150 = scmp.eq.s32.totalorder %s18, 0
      %p151 = por %p149, %p150
      %p152 = scmp.ne.s32.totalorder %s138, %s139
      %p153 = scmp.eq.s32.totalorder %s19, 1
      %p154 = por %p152, %p153
      %p156 = scmp.ne.s32.totalorder %s139, %s155
      %p157 = scmp.eq.s32.totalorder %s19, 0
      %p158 = por %p156, %p157
      %p159 = scmp.le.s32.totalorder 1, %s13
      %p160 = scmp.lt.s32.totalorder %s13, 3
      %p161 = pnand %p159, %p160
      %p162 = pneg %p161
      // Predicated region
      $region9: #{tpu_custom_call.1} parent=5 // pred_check
        _
      $region10: #{tpu_custom_call.1} parent=5 // pred_check_branch
        %164 = sbr.rel (%p161) target = $region12
      $region11: #{tpu_custom_call.1} parent=5 // pred_region
        %s165 = ssub.s32 %s13, 1
        // Predicated region
        $region13: #{tpu_custom_call.1} parent=11 // pred_check
          %p166 = pneg %p102
        $region14: #{tpu_custom_call.1} parent=11 // pred_check_branch
          %168 = sbr.rel (%p166) target = $region16
        $region15: #{tpu_custom_call.1} parent=11 // pred_region
          _
        $region16: #{tpu_custom_call.1} parent=11 // pred_fallthru
          _
        // Predicated region
        $region17: #{tpu_custom_call.1} parent=11 // pred_check
          %p169 = pneg %p123
        $region18: #{tpu_custom_call.1} parent=11 // pred_check_branch
          %171 = sbr.rel (%p169) target = $region20
        $region19: #{tpu_custom_call.1} parent=11 // pred_region
          _
        $region20: #{tpu_custom_call.1} parent=11 // pred_fallthru
          _
      $region12: #{tpu_custom_call.1} parent=5 // pred_fallthru
        _
      %p172 = scmp.lt.s32.totalorder %s13, 2
      // Predicated region
      $region21: #{tpu_custom_call.1} parent=5 // pred_check
        %p173 = pneg %p172
      $region22: #{tpu_custom_call.1} parent=5 // pred_check_branch
        %175 = sbr.rel (%p173) target = $region24
      $region23: #{tpu_custom_call.1} parent=5 // pred_region
        // Predicated region
        $region25: #{tpu_custom_call.1} parent=23 // pred_check
          %p176 = pneg %p47
        $region26: #{tpu_custom_call.1} parent=23 // pred_check_branch
          %178 = sbr.rel (%p176) target = $region28
        $region27: #{tpu_custom_call.1} parent=23 // pred_region
          %s179 = smul.u32 2, %s21
          %p180 = scmp.lt.s32.totalorder %s20, 1
          %s181 = scalar_select %p180, %s20, 1
          %p182 = scmp.lt.s32.totalorder %s179, 1
          %s183 = scalar_select %p182, %s179, 1
          %s184 = smul.addr %s181, 2
          %s185 = sadd.s32 %s183, %s184
          %s186 = smul.addr %s185, 4
          %s187 = scalar_lea.vmem %s0, %s186
          %s188 = smul.u32 2, %s21
        $region28: #{tpu_custom_call.1} parent=23 // pred_fallthru
          _
        // Predicated region
        $region29: #{tpu_custom_call.1} parent=23 // pred_check
          %p189 = pneg %p75
        $region30: #{tpu_custom_call.1} parent=23 // pred_check_branch
          %191 = sbr.rel (%p189) target = $region32
        $region31: #{tpu_custom_call.1} parent=23 // pred_region
          %p192 = scmp.lt.s32.totalorder %s20, 1
          %s193 = scalar_select %p192, %s20, 1
          %p194 = scmp.lt.s32.totalorder %s21, 0
          %s195 = scalar_select %p194, %s21, 0
          %s196 = sadd.s32 %s195, %s193
          %s197 = smul.addr %s196, 2
          %s198 = scalar_lea.vmem %s1, %s197
        $region32: #{tpu_custom_call.1} parent=23 // pred_fallthru
          _
      $region24: #{tpu_custom_call.1} parent=5 // pred_fallthru
        _
      %p199 = scmp.le.s32.totalorder 1, %s13
      %p200 = scmp.lt.s32.totalorder %s13, 3
      %p201 = pnand %p199, %p200
      %p202 = pneg %p201
      // Predicated region
      $region33: #{tpu_custom_call.1} parent=5 // pred_check
        _
      $region34: #{tpu_custom_call.1} parent=5 // pred_check_branch
        %204 = sbr.rel (%p201) target = $region36
      $region35: #{tpu_custom_call.1} parent=5 // pred_region
        %s205 = ssub.s32 %s13, 1
        %s206 = smul.u32 2, %s23
        %p207 = scmp.lt.s32.totalorder %s22, 1
        %s208 = scalar_select %p207, %s22, 1
        %p209 = scmp.lt.s32.totalorder %s206, 1
        %s210 = scalar_select %p209, %s206, 1
        %s211 = smul.addr %s208, 2
        %s212 = sadd.s32 %s210, %s211
        %s213 = smul.addr %s212, 4
        %s214 = scalar_lea.vmem %s0, %s213
        %p215 = pneg %p53
        %p216 = pneg %p50
        %p217 = scmp.lt.s32.totalorder %s22, 1
        %s218 = scalar_select %p217, %s22, 1
        %p219 = scmp.lt.s32.totalorder %s23, 0
        %s220 = scalar_select %p219, %s23, 0
        %s221 = sadd.s32 %s220, %s218
        %s222 = smul.addr %s221, 2
        %s223 = scalar_lea.vmem %s1, %s222
        %p224 = pneg %p81
        %p225 = pneg %p78
        %p226 = pneg %p102
        %p227 = pneg %p99
        %p228 = pneg %p123
        %p229 = pneg %p120
        %p230 = pneg %p151
        %p231 = pneg %p148
        %s232 = sand.u32 %s138, 1
        %s233 = scalar_lea.sflag [#allocation4], %s232
        %s234 = sand.u32 %s138, 1
        %s235 = smul.addr %s234, 16
        %s236 = scalar_lea.vmem [#allocation3], %s235
        %s237 = smul.u32 2, %s23
        %p238 = scmp.lt.s32.totalorder %s22, 1
        %s239 = scalar_select %p238, %s22, 1
        %p240 = scmp.lt.s32.totalorder %s237, 1
        %s241 = scalar_select %p240, %s237, 1
        %s242 = smul.addr %s239, 2
        %s243 = sadd.s32 %s241, %s242
        %s244 = smul.addr %s243, 4
        %s245 = scalar_lea.vmem %s0, %s244
        %s246 = smul.u32 2, %s23
        %p247 = scmp.lt.s32.totalorder %s22, 1
        %s248 = scalar_select %p247, %s22, 1
        %p249 = scmp.lt.s32.totalorder %s23, 0
        %s250 = scalar_select %p249, %s23, 0
        %s251 = sadd.s32 %s250, %s248
        %s252 = smul.addr %s251, 2
        %s253 = scalar_lea.vmem %s1, %s252
        %s254 = smul.u32 2, %s23
        %v256 = vld [vmem:[%s245] sm:$0xf]
        %v257 = vld [vmem:[%s245 + $0x4] sm:$0xf]
        %v258 = vld [vmem:[%s2] sm:$0x3]
        %vm259 = vcmask 27648
        %260 = vst.msk [vmem:[#allocation2] sm:$0xf] %vm259, %v256
        %261 = vst.msk [vmem:[#allocation2 + $0x4] sm:$0xf] %vm259, %v257
        %v262 = vld [vmem:[%s253] sm:$0x3]
        %vm263 = vcmask 25600
        %264 = vst.msk [vmem:[#allocation2 + $0x8] sm:$0x3] %vm263, %v262
        %v265 = vld [vmem:[#allocation2] sm:$0xf]
        %v266 = vld [vmem:[#allocation2 + $0x4] sm:$0xf]
        %v267 = vld [vmem:[#allocation2 + $0x8] sm:$0x1]
        %s268 = scalar_lea.vmem %s2, 2
        %v269 = vld [vmem:[%s268] sm:$0x3]
        %v273 = vunpack.c.l.b16 %v265
        %v274 = vunpack.c.l.b16 %v266
        %v275 = vunpack.c.l.b16 %v267
        %v276 = vpack.c.b16 %v274, %v273
        %v277 = vpack.c.b16 %v275, %v275
        %vm278 = vsmask.f32 7424
        %v280 = vshrl.u32 %v276, 16
        %v282 = vshll.u32 %v276, 16
        %v284 = vrot.slane %v282, 1
        %v285 = vor.u32 %v280, %v284
        %v287 = vshll.u32 %v277, 16
        %v289 = vrot.slane %v287, 1
        %v290 = vsel %vm278, %v285, %v289
        %vm291 = vcmask 31744
        %v293 = vsel %vm291, %v290, 0
        %vm295 = vcmask 1041408
        %v297 = vsel %vm295, %v269, 0
        %299 = vmatprep.subr.bf16.mxu0 0
        %300 = vmatpush1.bf16.msra.mxu0 %v297
        %301 = vmatprep.subr.bf16.mxu0 0
        %302 = vmatpush1.bf16.msra.mxu0 0
        %303 = vmatprep.subr.bf16.mxu0 0
        %304 = vmatpush1.bf16.msra.mxu0 0
        %305 = vmatprep.subr.bf16.mxu0 0
        %306 = vmatpush1.bf16.msra.mxu0 0
        %307 = vmatprep.subr.bf16.mxu0 0
        %308 = vmatpush1.bf16.msra.mxu0 0
        %309 = vmatprep.subr.bf16.mxu0 0
        %310 = vmatpush1.bf16.msra.mxu0 0
        %311 = vmatprep.subr.bf16.mxu0 0
        %312 = vmatpush1.bf16.msra.mxu0 0
        %313 = vmatprep.subr.bf16.mxu0 0
        %314 = vmatpush1.bf16.msra.mxu0 0
        %315 = vmatprep.subr.bf16.mxu0 0
        %316 = vmatpush1.bf16.msra.mxu0 0
        %317 = vmatprep.subr.bf16.mxu0 0
        %318 = vmatpush1.bf16.msra.mxu0 0
        %319 = vmatprep.subr.bf16.mxu0 0
        %320 = vmatpush1.bf16.msra.mxu0 0
        %321 = vmatprep.subr.bf16.mxu0 0
        %322 = vmatpush1.bf16.msra.mxu0 0
        %323 = vmatprep.subr.bf16.mxu0 0
        %324 = vmatpush1.bf16.msra.mxu0 0
        %325 = vmatprep.subr.bf16.mxu0 0
        %326 = vmatpush1.bf16.msra.mxu0 0
        %327 = vmatprep.subr.bf16.mxu0 0
        %328 = vmatpush1.bf16.msra.mxu0 0
        %329 = vmatprep.subr.bf16.mxu0 0
        %330 = vmatpush1.bf16.msra.mxu0 0
        %331 = vmatprep.mubr.bf16.mxu0 0
        %332 = vmatmul.mubr.bf16.gmra.mrb[0].mxu0 %v293
        %v333 = vpop.f32.mrb[0].mxu0
        %v334 = vadd.f32 0.0, %v333
        %v335 = vpop.f32.mrb[0].mxu0
        %v336 = vpop.f32.mrb[0].mxu0
        %v337 = vadd.f32 0.0, %v336
        %v338 = vpop.f32.mrb[0].mxu0
        %339 = vdwg.mxu0
        %v342 = vunpack.c.l.b16 %v256
        %v343 = vunpack.c.l.b16 %v257
        %v344 = vpack.c.b16 %v343, %v342
        %v346 = vsel %vm291, %v344, 0
        %v349 = vsel %vm295, %v258, 0
        %351 = vmatprep.subr.bf16.mxu0 0
        %352 = vmatpush1.bf16.msra.mxu0 %v349
        %353 = vmatprep.subr.bf16.mxu0 0
        %354 = vmatpush1.bf16.msra.mxu0 0
        %355 = vmatprep.subr.bf16.mxu0 0
        %356 = vmatpush1.bf16.msra.mxu0 0
        %357 = vmatprep.subr.bf16.mxu0 0
        %358 = vmatpush1.bf16.msra.mxu0 0
        %359 = vmatprep.subr.bf16.mxu0 0
        %360 = vmatpush1.bf16.msra.mxu0 0
        %361 = vmatprep.subr.bf16.mxu0 0
        %362 = vmatpush1.bf16.msra.mxu0 0
        %363 = vmatprep.subr.bf16.mxu0 0
        %364 = vmatpush1.bf16.msra.mxu0 0
        %365 = vmatprep.subr.bf16.mxu0 0
        %366 = vmatpush1.bf16.msra.mxu0 0
        %367 = vmatprep.subr.bf16.mxu0 0
        %368 = vmatpush1.bf16.msra.mxu0 0
        %369 = vmatprep.subr.bf16.mxu0 0
        %370 = vmatpush1.bf16.msra.mxu0 0
        %371 = vmatprep.subr.bf16.mxu0 0
        %372 = vmatpush1.bf16.msra.mxu0 0
        %373 = vmatprep.subr.bf16.mxu0 0
        %374 = vmatpush1.bf16.msra.mxu0 0
        %375 = vmatprep.subr.bf16.mxu0 0
        %376 = vmatpush1.bf16.msra.mxu0 0
        %377 = vmatprep.subr.bf16.mxu0 0
        %378 = vmatpush1.bf16.msra.mxu0 0
        %379 = vmatprep.subr.bf16.mxu0 0
        %380 = vmatpush1.bf16.msra.mxu0 0
        %381 = vmatprep.subr.bf16.mxu0 0
        %382 = vmatpush1.bf16.msra.mxu0 0
        %383 = vmatprep.mubr.bf16.mxu0 0
        %384 = vmatmul.mubr.bf16.gmra.mrb[0].mxu0 %v346
        %v385 = vpop.f32.mrb[0].mxu0
        %v386 = vadd.f32 %v334, %v385
        %v387 = vpop.f32.mrb[0].mxu0
        %v388 = vpop.f32.mrb[0].mxu0
        %v389 = vadd.f32 %v337, %v388
        %v390 = vpop.f32.mrb[0].mxu0
        %391 = vdwg.mxu0
        %v392 = vld [vmem:[#allocation2] sm:$0xe]
        %s393 = scalar_lea.vmem %s2, 4
        %v394 = vld [vmem:[%s393] sm:$0x3]
        %v396 = vunpack.c.l.b16 %v392
        %v397 = vpack.c.b16 %v274, %v396
        %vm398 = vcmask 1046528
        %v399 = vrot.slane %v397, 1
        %v400 = vrot.slane %v277, 1
        %v401 = vsel %vm398, %v399, %v400
        %v403 = vsel %vm291, %v401, 0
        %v406 = vsel %vm295, %v394, 0
        %408 = vmatprep.subr.bf16.mxu0 0
        %409 = vmatpush1.bf16.msra.mxu0 %v406
        %410 = vmatprep.subr.bf16.mxu0 0
        %411 = vmatpush1.bf16.msra.mxu0 0
        %412 = vmatprep.subr.bf16.mxu0 0
        %413 = vmatpush1.bf16.msra.mxu0 0
        %414 = vmatprep.subr.bf16.mxu0 0
        %415 = vmatpush1.bf16.msra.mxu0 0
        %416 = vmatprep.subr.bf16.mxu0 0
        %417 = vmatpush1.bf16.msra.mxu0 0
        %418 = vmatprep.subr.bf16.mxu0 0
        %419 = vmatpush1.bf16.msra.mxu0 0
        %420 = vmatprep.subr.bf16.mxu0 0
        %421 = vmatpush1.bf16.msra.mxu0 0
        %422 = vmatprep.subr.bf16.mxu0 0
        %423 = vmatpush1.bf16.msra.mxu0 0
        %424 = vmatprep.subr.bf16.mxu0 0
        %425 = vmatpush1.bf16.msra.mxu0 0
        %426 = vmatprep.subr.bf16.mxu0 0
        %427 = vmatpush1.bf16.msra.mxu0 0
        %428 = vmatprep.subr.bf16.mxu0 0
        %429 = vmatpush1.bf16.msra.mxu0 0
        %430 = vmatprep.subr.bf16.mxu0 0
        %431 = vmatpush1.bf16.msra.mxu0 0
        %432 = vmatprep.subr.bf16.mxu0 0
        %433 = vmatpush1.bf16.msra.mxu0 0
        %434 = vmatprep.subr.bf16.mxu0 0
        %435 = vmatpush1.bf16.msra.mxu0 0
        %436 = vmatprep.subr.bf16.mxu0 0
        %437 = vmatpush1.bf16.msra.mxu0 0
        %438 = vmatprep.subr.bf16.mxu0 0
        %439 = vmatpush1.bf16.msra.mxu0 0
        %440 = vmatprep.mubr.bf16.mxu0 0
        %441 = vmatmul.mubr.bf16.gmra.mrb[0].mxu0 %v403
        %v442 = vpop.f32.mrb[0].mxu0
        %v443 = vadd.f32 0.0, %v442
        %v444 = vpop.f32.mrb[0].mxu0
        %v445 = vpop.f32.mrb[0].mxu0
        %v446 = vadd.f32 0.0, %v445
        %v447 = vpop.f32.mrb[0].mxu0
        %448 = vdwg.mxu0
        %v449 = vadd.f32 %v386, %v443
        %v450 = vadd.f32 %v389, %v446
        %v451 = vld [vmem:[#allocation2 + $0x8] sm:$0x3]
        %s452 = scalar_lea.vmem %s2, 6
        %v453 = vld [vmem:[%s452] sm:$0x3]
        %v455 = vunpack.c.l.b16 %v451
        %v456 = vpack.c.b16 %v455, %v455
        %vm457 = vsmask.f32 6400
        %v459 = vshrl.u32 %v397, 16
        %v461 = vrot.slane %v459, 1
        %v462 = vshll.u32 %v397, 16
        %v464 = vrot.slane %v462, 2
        %v465 = vor.u32 %v461, %v464
        %v467 = vshrl.u32 %v456, 16
        %v469 = vrot.slane %v467, 1
        %v470 = vshll.u32 %v456, 16
        %v472 = vrot.slane %v470, 2
        %v473 = vor.u32 %v469, %v472
        %v474 = vsel %vm457, %v465, %v473
        %v476 = vsel %vm291, %v474, 0
        %v479 = vsel %vm295, %v453, 0
        %481 = vmatprep.subr.bf16.mxu0 0
        %482 = vmatpush1.bf16.msra.mxu0 %v479
        %483 = vmatprep.subr.bf16.mxu0 0
        %484 = vmatpush1.bf16.msra.mxu0 0
        %485 = vmatprep.subr.bf16.mxu0 0
        %486 = vmatpush1.bf16.msra.mxu0 0
        %487 = vmatprep.subr.bf16.mxu0 0
        %488 = vmatpush1.bf16.msra.mxu0 0
        %489 = vmatprep.subr.bf16.mxu0 0
        %490 = vmatpush1.bf16.msra.mxu0 0
        %491 = vmatprep.subr.bf16.mxu0 0
        %492 = vmatpush1.bf16.msra.mxu0 0
        %493 = vmatprep.subr.bf16.mxu0 0
        %494 = vmatpush1.bf16.msra.mxu0 0
        %495 = vmatprep.subr.bf16.mxu0 0
        %496 = vmatpush1.bf16.msra.mxu0 0
        %497 = vmatprep.subr.bf16.mxu0 0
        %498 = vmatpush1.bf16.msra.mxu0 0
        %499 = vmatprep.subr.bf16.mxu0 0
        %500 = vmatpush1.bf16.msra.mxu0 0
        %501 = vmatprep.subr.bf16.mxu0 0
        %502 = vmatpush1.bf16.msra.mxu0 0
        %503 = vmatprep.subr.bf16.mxu0 0
        %504 = vmatpush1.bf16.msra.mxu0 0
        %505 = vmatprep.subr.bf16.mxu0 0
        %506 = vmatpush1.bf16.msra.mxu0 0
        %507 = vmatprep.subr.bf16.mxu0 0
        %508 = vmatpush1.bf16.msra.mxu0 0
        %509 = vmatprep.subr.bf16.mxu0 0
        %510 = vmatpush1.bf16.msra.mxu0 0
        %511 = vmatprep.subr.bf16.mxu0 0
        %512 = vmatpush1.bf16.msra.mxu0 0
        %513 = vmatprep.mubr.bf16.mxu0 0
        %514 = vmatmul.mubr.bf16.gmra.mrb[0].mxu0 %v476
        %v515 = vpop.f32.mrb[0].mxu0
        %v516 = vadd.f32 0.0, %v515
        %v517 = vpop.f32.mrb[0].mxu0
        %v518 = vpop.f32.mrb[0].mxu0
        %v519 = vadd.f32 0.0, %v518
        %v520 = vpop.f32.mrb[0].mxu0
        %521 = vdwg.mxu0
        %v522 = vadd.f32 %v449, %v516
        %v523 = vadd.f32 %v450, %v519
        %v524 = vld [vmem:[#allocation2] sm:$0xc]
        %s525 = scalar_lea.vmem %s2, 8
        %v526 = vld [vmem:[%s525] sm:$0x3]
        %v528 = vunpack.c.l.b16 %v524
        %v529 = vpack.c.b16 %v274, %v528
        %vm530 = vcmask 1045504
        %v531 = vrot.slane %v529, 2
        %v532 = vrot.slane %v456, 2
        %v533 = vsel %vm530, %v531, %v532
        %v535 = vsel %vm291, %v533, 0
        %v538 = vsel %vm295, %v526, 0
        %540 = vmatprep.subr.bf16.mxu0 0
        %541 = vmatpush1.bf16.msra.mxu0 %v538
        %542 = vmatprep.subr.bf16.mxu0 0
        %543 = vmatpush1.bf16.msra.mxu0 0
        %544 = vmatprep.subr.bf16.mxu0 0
        %545 = vmatpush1.bf16.msra.mxu0 0
        %546 = vmatprep.subr.bf16.mxu0 0
        %547 = vmatpush1.bf16.msra.mxu0 0
        %548 = vmatprep.subr.bf16.mxu0 0
        %549 = vmatpush1.bf16.msra.mxu0 0
        %550 = vmatprep.subr.bf16.mxu0 0
        %551 = vmatpush1.bf16.msra.mxu0 0
        %552 = vmatprep.subr.bf16.mxu0 0
        %553 = vmatpush1.bf16.msra.mxu0 0
        %554 = vmatprep.subr.bf16.mxu0 0
        %555 = vmatpush1.bf16.msra.mxu0 0
        %556 = vmatprep.subr.bf16.mxu0 0
        %557 = vmatpush1.bf16.msra.mxu0 0
        %558 = vmatprep.subr.bf16.mxu0 0
        %559 = vmatpush1.bf16.msra.mxu0 0
        %560 = vmatprep.subr.bf16.mxu0 0
        %561 = vmatpush1.bf16.msra.mxu0 0
        %562 = vmatprep.subr.bf16.mxu0 0
        %563 = vmatpush1.bf16.msra.mxu0 0
        %564 = vmatprep.subr.bf16.mxu0 0
        %565 = vmatpush1.bf16.msra.mxu0 0
        %566 = vmatprep.subr.bf16.mxu0 0
        %567 = vmatpush1.bf16.msra.mxu0 0
        %568 = vmatprep.subr.bf16.mxu0 0
        %569 = vmatpush1.bf16.msra.mxu0 0
        %570 = vmatprep.subr.bf16.mxu0 0
        %571 = vmatpush1.bf16.msra.mxu0 0
        %572 = vmatprep.mubr.bf16.mxu0 0
        %573 = vmatmul.mubr.bf16.gmra.mrb[0].mxu0 %v535
        %v574 = vpop.f32.mrb[0].mxu0
        %v575 = vadd.f32 0.0, %v574
        %v576 = vpop.f32.mrb[0].mxu0
        %v577 = vpop.f32.mrb[0].mxu0
        %v578 = vadd.f32 0.0, %v577
        %v579 = vpop.f32.mrb[0].mxu0
        %580 = vdwg.mxu0
        %v581 = vadd.f32 %v522, %v575
        %v582 = vadd.f32 %v523, %v578
        %v583 = vld [vmem:[%s3] sm:$0x1]
        %v585 = vlaneseq
        %v586 = vshrl.u32 %v585, 7
        %v587 = vsub.s32 0, %v586
        %v588 = vrot.slane %v583, %v587
        %v590 = vadd.f32 %v581, %v588
        %v591 = vadd.f32 %v582, %v588
        %v592 = vmax.f32 %v590, 0.0
        %v593 = vmax.f32 %v591, 0.0
        %594 = vst [vmem:[%s236] sm:$0xff] %v592
        %595 = vst [vmem:[%s236 + $0x8] sm:$0xff] %v593
        %s596 = sand.u32 %s138, 1
        %s597 = scalar_lea.sflag [#allocation4], %s596
        %s598 = sand.u32 %s138, 1
        %s599 = smul.addr %s598, 16
        %s600 = scalar_lea.vmem [#allocation3], %s599
        // Predicated region
        $region37: #{tpu_custom_call.1} parent=35 // pred_check
          %p601 = pneg %p148
        $region38: #{tpu_custom_call.1} parent=35 // pred_check_branch
          %603 = sbr.rel (%p601) target = $region40
        $region39: #{tpu_custom_call.1} parent=35 // pred_region
          %s604 = smul.u32 2, %s23
          %s606 = ssub.s32 256, 256
          %607 = vsyncadd %s597, %s606
          %s608 = smul.addr %s22, 2
          %s609 = sadd.s32 %s604, %s608
          %s610 = smul.addr %s609, 128
          %s611 = scalar_lea.hbm %s4, %s610
          %s612 = sshll.u32 %s600, 4
          %s613 = int_to_ptr.vmem [resolvable:$true] %s612
          %618 = dma.vmem_to_hbm [thread:$0]  %s613, 256, %s611, %s597, 128, 128, 8
        $region40: #{tpu_custom_call.1} parent=35 // pred_fallthru
          _
      $region36: #{tpu_custom_call.1} parent=5 // pred_fallthru
        _
      %p619 = scmp.le.s32.totalorder 2, %s13
      // Predicated region
      $region41: #{tpu_custom_call.1} parent=5 // pred_check
        %p620 = pneg %p619
      $region42: #{tpu_custom_call.1} parent=5 // pred_check_branch
        %622 = sbr.rel (%p620) target = $region44
      $region43: #{tpu_custom_call.1} parent=5 // pred_region
        %s623 = ssub.s32 %s13, 2
        // Predicated region
        $region45: #{tpu_custom_call.1} parent=43 // pred_check
          %p624 = pneg %p154
        $region46: #{tpu_custom_call.1} parent=43 // pred_check_branch
          %626 = sbr.rel (%p624) target = $region48
        $region47: #{tpu_custom_call.1} parent=43 // pred_region
          %s627 = sand.u32 %s139, 1
          %s628 = scalar_lea.sflag [#allocation4], %s627
          %s629 = sand.u32 %s139, 1
          %s630 = smul.addr %s629, 16
          %s631 = scalar_lea.vmem [#allocation3], %s630
          %632 = dma.done %s628, 256
        $region48: #{tpu_custom_call.1} parent=43 // pred_fallthru
          _
      $region44: #{tpu_custom_call.1} parent=5 // pred_fallthru
        _
    $region6: #{tpu_custom_call.1} parent=1 // loop_footer
      %s17 = sadd.s32 1, %s13
    $region7: #{tpu_custom_call.1} parent=1 // loop_footer_branch
      %12 = sbr.rel target = $region3
    $region8: #{tpu_custom_call.1} parent=1 // loop_exit
      _
    %633 = vsyncpa [#allocation4], 1
    %s634 = scalar_lea.sflag [#allocation4], 1
    %635 = vsyncpa %s634, 1

</llo_original>
